<compile_context>
chip_gen: v7x
topology: tpu7x:2x2x1
jax: 0.10.0
libtpu: 0.0.40
codegen_flags: <defaults>
</compile_context>

<pallas_src>
import functools

import jax
import jax.numpy as jnp
from jax.experimental import pallas as pl
from jax.experimental.pallas import tpu as pltpu


def _mlp_kernel(x_ref, w1_ref, b1_ref, w2_ref, b2_ref, o_ref):
    # fc1 on the MXU: cast the resident f32 activation tile to bf16 in VMEM
    # (no extra HBM pass), accumulate in f32.
    x_bf16 = x_ref[...].astype(jnp.bfloat16)
    h = jnp.dot(x_bf16, w1_ref[...], preferred_element_type=jnp.float32)
    # bias + ReLU in f32 (VPU)
    h = jnp.maximum(h + b1_ref[...], 0.0)
    # fc2 as lane-major multiply + lane reduction (VPU/XLU); w2 is (1, H).
    y = jnp.sum(h * w2_ref[...], axis=-1) + b2_ref[0, 0]          # (TB,)
    # sigmoid = 1 / (1 + exp(-y)): exp and approx reciprocal both land on the EUP.
    sig = pl.reciprocal(1.0 + jnp.exp(-y), approx=True)
    # lane-dense store: output block is (1, TB)
    o_ref[...] = sig.reshape(1, -1)


def _round_up(n, m):
    return ((n + m - 1) // m) * m


@functools.partial(jax.jit, static_argnames=("tb",))
def embedding_classifier(x, w1, b1, w2, b2, *, tb=1024):
    """Forward pass of EmbeddingClassifier.

    x:  (B, D) float32
    w1: (D, 512) float32   (transposed PyTorch fc1.weight)
    b1: (1, 512) float32
    w2: (1, 512) float32   (PyTorch fc2.weight layout, lane-major)
    b2: (1, 1)   float32
    returns: (B, 1) float32 in (0, 1)
    """
    B, D = x.shape
    H = w1.shape[1]

    # Batch tile: at most `tb`, at least the 8-aligned padded batch.
    tile_b = min(tb, _round_up(B, 8))
    num_tiles = pl.cdiv(B, tile_b)
    b_pad = num_tiles * tile_b
    if b_pad != B:
        x = jnp.pad(x, ((0, b_pad - B), (0, 0)))

    # w1 is small and grid-resident: pre-cast once. x is cast inside the kernel.
    w1_bf16 = w1.astype(jnp.bfloat16)

    out = pl.pallas_call(
        _mlp_kernel,
        out_shape=jax.ShapeDtypeStruct((1, b_pad), jnp.float32),
        grid=(num_tiles,),
        in_specs=[
            pl.BlockSpec((tile_b, D), lambda i: (i, 0)),           # x tile (pipelined)
            pl.BlockSpec((D, H), lambda i: (0, 0)),                # w1 resident (bf16)
            pl.BlockSpec((1, H), lambda i: (0, 0)),                # b1 resident
            pl.BlockSpec((1, H), lambda i: (0, 0)),                # w2 resident, lane-major
            pl.BlockSpec(memory_space=pltpu.MemorySpace.SMEM),     # b2 scalar
        ],
        out_specs=pl.BlockSpec((1, tile_b), lambda i: (0, i)),
        compiler_params=pltpu.CompilerParams(
            dimension_semantics=("parallel",),
        ),
    )(x, w1_bf16, b1, w2, b2)

    # (1, b_pad) lane-dense slab -> (B, 1); contiguous reshape, slice drops padding.
    return out.reshape(b_pad, 1)[:B]


def init_params(key, input_size, hidden=512):
    """Deterministic init mirroring nn.Linear's U(-1/sqrt(fan_in), 1/sqrt(fan_in))."""
    k1, k2, k3, k4 = jax.random.split(key, 4)
    bound1 = 1.0 / jnp.sqrt(input_size)
    bound2 = 1.0 / jnp.sqrt(hidden)
    w1 = jax.random.uniform(k1, (input_size, hidden), jnp.float32, -bound1, bound1)
    b1 = jax.random.uniform(k2, (1, hidden), jnp.float32, -bound1, bound1)
    w2 = jax.random.uniform(k3, (1, hidden), jnp.float32, -bound2, bound2)
    b2 = jax.random.uniform(k4, (1, 1), jnp.float32, -bound2, bound2)
    return w1, b1, w2, b2


if __name__ == "__main__":
    key = jax.random.PRNGKey(0)
    kx, kp = jax.random.split(key)

    batch = 8
    input_size = 128  # embedding dimension fed to the classifier

    x = jax.random.normal(kx, (batch, input_size), jnp.float32)
    w1, b1, w2, b2 = init_params(kp, input_size)

    out = embedding_classifier(x, w1, b1, w2, b2)
    out = jax.block_until_ready(out)

    # Reference check in plain JAX (f32 end-to-end).
    h_ref = jnp.maximum(x @ w1 + b1, 0.0)
    ref = jax.nn.sigmoid(jnp.sum(h_ref * w2, axis=-1, keepdims=True) + b2)

    assert out.shape == (batch, 1)
    # Loose tolerance covers bf16 fc1 operands + approx reciprocal in the sigmoid.
    assert jnp.allclose(out, ref, atol=2e-2, rtol=2e-2)

    print("KERNEL_OK")
</pallas_src>

<mosaic_0001>
module attributes {stable_mosaic.version = 11 : i64} {
  func.func @_mlp_kernel(%arg0: i32, %arg1: memref<8x128xf32, #tpu.memory_space<vmem>>, %arg2: memref<128x512xbf16, #tpu.memory_space<vmem>>, %arg3: memref<1x512xf32, #tpu.memory_space<vmem>>, %arg4: memref<1x512xf32, #tpu.memory_space<vmem>>, %arg5: memref<1x1xf32, #tpu.memory_space<smem>>, %arg6: memref<1x8xf32, #tpu.memory_space<vmem>>) attributes {dimension_semantics = [#tpu.dimension_semantics<parallel>], iteration_bounds = array<i64: 1>, scalar_prefetch = 0 : i64, scratch_operands = 0 : i64, tpu.core_type = #tpu.core_type<tc>, window_params = [{transform_indices = @transform_0, window_bounds = array<i64: 8, 128>}, {pipeline_mode = #tpu.pipeline_mode<synchronous>, transform_indices = @transform_1, window_bounds = array<i64: 128, 512>}, {pipeline_mode = #tpu.pipeline_mode<synchronous>, transform_indices = @transform_2, window_bounds = array<i64: 1, 512>}, {pipeline_mode = #tpu.pipeline_mode<synchronous>, transform_indices = @transform_3, window_bounds = array<i64: 1, 512>}, {transform_indices = @transform_4, window_bounds = array<i64: 1, 1>}, {transform_indices = @transform_5, window_bounds = array<i64: 1, 8>}]} {
    %c0 = arith.constant 0 : index
    %c0_0 = arith.constant 0 : index
    %0 = vector.load %arg1[%c0, %c0_0] : memref<8x128xf32, #tpu.memory_space<vmem>>, vector<8x128xf32>
    %1 = arith.truncf %0 : vector<8x128xf32> to vector<8x128xbf16>
    %c0_1 = arith.constant 0 : index
    %c0_2 = arith.constant 0 : index
    %2 = vector.load %arg2[%c0_1, %c0_2] : memref<128x512xbf16, #tpu.memory_space<vmem>>, vector<128x512xbf16>
    %cst = arith.constant dense<0.000000e+00> : vector<8x512xf32>
    %3 = tpu.matmul %1, %2, %cst {dimension_numbers = #tpu.dot_dimension_numbers<[1], [0], [0], [1], [0, 0, 1, 1], [], []>} : vector<8x128xbf16>, vector<128x512xbf16>, vector<8x512xf32> -> vector<8x512xf32>
    %c0_3 = arith.constant 0 : index
    %c0_4 = arith.constant 0 : index
    %4 = vector.load %arg3[%c0_3, %c0_4] : memref<1x512xf32, #tpu.memory_space<vmem>>, vector<1x512xf32>
    %5 = vector.broadcast %4 : vector<1x512xf32> to vector<8x512xf32>
    %6 = arith.addf %3, %5 : vector<8x512xf32>
    %cst_5 = arith.constant 0.000000e+00 : f32
    %7 = vector.broadcast %cst_5 : f32 to vector<8x512xf32>
    %8 = arith.maximumf %6, %7 : vector<8x512xf32>
    %c0_6 = arith.constant 0 : index
    %c0_7 = arith.constant 0 : index
    %9 = vector.load %arg4[%c0_6, %c0_7] : memref<1x512xf32, #tpu.memory_space<vmem>>, vector<1x512xf32>
    %10 = vector.broadcast %9 : vector<1x512xf32> to vector<8x512xf32>
    %11 = arith.mulf %8, %10 : vector<8x512xf32>
    %cst_8 = arith.constant dense<0.000000e+00> : vector<8xf32>
    %12 = vector.multi_reduction <add>, %11, %cst_8 [1] : vector<8x512xf32> to vector<8xf32>
    %c0_9 = arith.constant 0 : index
    %c0_10 = arith.constant 0 : index
    %13 = memref.load %arg5[%c0_9, %c0_10] : memref<1x1xf32, #tpu.memory_space<smem>>
    %14 = vector.broadcast %13 : f32 to vector<8xf32>
    %15 = arith.addf %12, %14 : vector<8xf32>
    %cst_11 = arith.constant 0.000000e+00 : f32
    %16 = vector.broadcast %cst_11 : f32 to vector<8xf32>
    %17 = arith.subf %16, %15 : vector<8xf32>
    %18 = math.exp %17 : vector<8xf32>
    %cst_12 = arith.constant 1.000000e+00 : f32
    %19 = vector.broadcast %cst_12 : f32 to vector<8xf32>
    %20 = arith.addf %19, %18 : vector<8xf32>
    %21 = tpu.reciprocal %20 {approx = true} : vector<8xf32> -> vector<8xf32>
    %22 = vector.shape_cast %21 : vector<8xf32> to vector<1x8xf32>
    %c0_13 = arith.constant 0 : index
    %c0_14 = arith.constant 0 : index
    %23 = vector.load %arg6[%c0_13, %c0_14] : memref<1x8xf32, #tpu.memory_space<vmem>>, vector<1x8xf32>
    tpu.vector_store %arg6[%c0_13, %c0_14], %22 {strides = array<i32>} : memref<1x8xf32, #tpu.memory_space<vmem>>, vector<1x8xf32>,
    return
  }
  func.func @transform_0(%arg0: i32) -> (i32, i32) {
    %c0_i32 = arith.constant 0 : i32
    %c0_i32_0 = arith.constant 0 : i32
    return %arg0, %c0_i32 : i32, i32
  }
  func.func @transform_1(%arg0: i32) -> (i32, i32) {
    %c0_i32 = arith.constant 0 : i32
    %c0_i32_0 = arith.constant 0 : i32
    %c0_i32_1 = arith.constant 0 : i32
    return %c0_i32, %c0_i32_0 : i32, i32
  }
  func.func @transform_2(%arg0: i32) -> (i32, i32) {
    %c0_i32 = arith.constant 0 : i32
    %c0_i32_0 = arith.constant 0 : i32
    %c0_i32_1 = arith.constant 0 : i32
    return %c0_i32, %c0_i32_0 : i32, i32
  }
  func.func @transform_3(%arg0: i32) -> (i32, i32) {
    %c0_i32 = arith.constant 0 : i32
    %c0_i32_0 = arith.constant 0 : i32
    %c0_i32_1 = arith.constant 0 : i32
    return %c0_i32, %c0_i32_0 : i32, i32
  }
  func.func @transform_4(%arg0: i32) -> (i32, i32) {
    %c0_i32 = arith.constant 0 : i32
    %c0_i32_0 = arith.constant 0 : i32
    %c0_i32_1 = arith.constant 0 : i32
    return %c0_i32, %c0_i32_0 : i32, i32
  }
  func.func @transform_5(%arg0: i32) -> (i32, i32) {
    %c0_i32 = arith.constant 0 : i32
    %c0_i32_0 = arith.constant 0 : i32
    return %c0_i32, %arg0 : i32, i32
  }
}

</mosaic_0001>

<llo_original>
// kernel: embedding_classifier.1
$region0: #{embedding_classifier.1}
  #allocation0 [shape = 'u32[]', space=smem, size = 0x4, offset = 0x4, fixed_abs, tag = 'smem constant byte address 0x4 - core index']
  #allocation1 [shape = 'u32[144,128]{1,0:T(1,128)}', space=vmem, size = 0x12000, scoped, tag = 'internal scratch']
  #allocation2 [shape = 'f32[1,1]{1,0:T(1,128)S(6)}', space=smem, size = 0x200, scoped, tag = 'scoped memory for embedding_classifier.1']
  %s0 = inlined_call_operand.vmem [shape: f32[8,128], index: 0, kind: input, shape index: {}]
  %s1 = inlined_call_operand.vmem [shape: bf16[128,512], index: 1, kind: input, shape index: {}]
  %s2 = inlined_call_operand.vmem [shape: f32[1,512], index: 2, kind: input, shape index: {}]
  %s3 = inlined_call_operand.vmem [shape: f32[1,512], index: 3, kind: input, shape index: {}]
  %s4 = inlined_call_operand.<no memory space> [shape: f32[1,1], index: 4, kind: input, shape index: {}]
  %s5 = inlined_call_operand.hbm [shape: f32[1,8], index: 5, kind: output, shape index: {}]
  %s6 = sld [smem:[#allocation0]]
  $region30: #{embedding_classifier.1} parent=0
    _
  %s8 = ssub.s32 1, %s6
  %s9 = scalar_select 0, %s8, %s6
  %10 = sst [smem:[#allocation2]] %s4
  $region1: #{embedding_classifier.1} parent=0
    #allocation3 [shape = 'u8[512]{0}', space=vmem, size = 0x400, scoped, tag = 'output window, operand 0, single buffered']
    #allocation4 [shape = 's32[1]{0}', space=sflag, size = 0x4, scoped, tag = 'scoped memory for embedding_classifier.1']
    %11 = vsyncpa [#allocation4], 0
    // Predicated region
    $region2: #{embedding_classifier.1} parent=1 // pred_check
      _
    $region3: #{embedding_classifier.1} parent=1 // pred_check_branch
      %13 = sbr.rel (0) target = $region5
    $region4: #{embedding_classifier.1} parent=1 // pred_region
      _
    $region5: #{embedding_classifier.1} parent=1 // pred_fallthru
      _
    // Predicated region
    $region6: #{embedding_classifier.1} parent=1 // pred_check
      _
    $region7: #{embedding_classifier.1} parent=1 // pred_check_branch
      %15 = sbr.rel (0) target = $region9
    $region8: #{embedding_classifier.1} parent=1 // pred_region
      _
    $region9: #{embedding_classifier.1} parent=1 // pred_fallthru
      _
    // Predicated region
    $region10: #{embedding_classifier.1} parent=1 // pred_check
      _
    $region11: #{embedding_classifier.1} parent=1 // pred_check_branch
      %17 = sbr.rel (0) target = $region13
    $region12: #{embedding_classifier.1} parent=1 // pred_region
      _
    $region13: #{embedding_classifier.1} parent=1 // pred_fallthru
      _
    // Predicated region
    $region14: #{embedding_classifier.1} parent=1 // pred_check
      _
    $region15: #{embedding_classifier.1} parent=1 // pred_check_branch
      %19 = sbr.rel (0) target = $region17
    $region16: #{embedding_classifier.1} parent=1 // pred_region
      _
    $region17: #{embedding_classifier.1} parent=1 // pred_fallthru
      _
    // Predicated region
    $region18: #{embedding_classifier.1} parent=1 // pred_check
      _
    $region19: #{embedding_classifier.1} parent=1 // pred_check_branch
      %21 = sbr.rel (0) target = $region21
    $region20: #{embedding_classifier.1} parent=1 // pred_region
      _
    $region21: #{embedding_classifier.1} parent=1 // pred_fallthru
      _
    %v23 = vld [vmem:[%s0] sm:$0xff]
    %v24 = vpack.c.bf16 %v23, %v23
    %v25 = vld [vmem:[%s1] sm:$0xff]
    %v26 = vld [vmem:[%s1 + $0x8] sm:$0xff]
    %v27 = vld [vmem:[%s1 + $0x10] sm:$0xff]
    %v28 = vld [vmem:[%s1 + $0x18] sm:$0xff]
    %v29 = vld [vmem:[%s1 + $0x20] sm:$0xff]
    %v30 = vld [vmem:[%s1 + $0x28] sm:$0xff]
    %v31 = vld [vmem:[%s1 + $0x30] sm:$0xff]
    %v32 = vld [vmem:[%s1 + $0x38] sm:$0xff]
    %v33 = vld [vmem:[%s1 + $0x40] sm:$0xff]
    %v34 = vld [vmem:[%s1 + $0x48] sm:$0xff]
    %v35 = vld [vmem:[%s1 + $0x50] sm:$0xff]
    %v36 = vld [vmem:[%s1 + $0x58] sm:$0xff]
    %v37 = vld [vmem:[%s1 + $0x60] sm:$0xff]
    %v38 = vld [vmem:[%s1 + $0x68] sm:$0xff]
    %v39 = vld [vmem:[%s1 + $0x70] sm:$0xff]
    %v40 = vld [vmem:[%s1 + $0x78] sm:$0xff]
    %v41 = vld [vmem:[%s1 + $0x80] sm:$0xff]
    %v42 = vld [vmem:[%s1 + $0x88] sm:$0xff]
    %v43 = vld [vmem:[%s1 + $0x90] sm:$0xff]
    %v44 = vld [vmem:[%s1 + $0x98] sm:$0xff]
    %v45 = vld [vmem:[%s1 + $0xa0] sm:$0xff]
    %v46 = vld [vmem:[%s1 + $0xa8] sm:$0xff]
    %v47 = vld [vmem:[%s1 + $0xb0] sm:$0xff]
    %v48 = vld [vmem:[%s1 + $0xb8] sm:$0xff]
    %v49 = vld [vmem:[%s1 + $0xc0] sm:$0xff]
    %v50 = vld [vmem:[%s1 + $0xc8] sm:$0xff]
    %v51 = vld [vmem:[%s1 + $0xd0] sm:$0xff]
    %v52 = vld [vmem:[%s1 + $0xd8] sm:$0xff]
    %v53 = vld [vmem:[%s1 + $0xe0] sm:$0xff]
    %v54 = vld [vmem:[%s1 + $0xe8] sm:$0xff]
    %v55 = vld [vmem:[%s1 + $0xf0] sm:$0xff]
    %v56 = vld [vmem:[%s1 + $0xf8] sm:$0xff]
    %v57 = vld [vmem:[%s2] sm:$0xf]
    %v59 = vlaneseq
    %v60 = vshrl.u32 %v59, 7
    %v61 = vsub.s32 0, %v60
    %v62 = vrot.slane %v57, %v61
    %v63 = vlaneseq
    %v64 = vshrl.u32 %v63, 7
    %v65 = vsub.s32 1, %v64
    %v66 = vrot.slane %v57, %v65
    %v67 = vlaneseq
    %v68 = vshrl.u32 %v67, 7
    %v69 = vsub.s32 2, %v68
    %v70 = vrot.slane %v57, %v69
    %v71 = vlaneseq
    %v72 = vshrl.u32 %v71, 7
    %v73 = vsub.s32 3, %v72
    %v74 = vrot.slane %v57, %v73
    %v111 = vunpack.c.l.b16 %v25
    %v112 = vunpack.c.h.b16 %v25
    %v113 = vunpack.c.l.b16 %v26
    %v114 = vunpack.c.h.b16 %v26
    %v115 = vunpack.c.l.b16 %v27
    %v116 = vunpack.c.h.b16 %v27
    %v117 = vunpack.c.l.b16 %v28
    %v118 = vunpack.c.h.b16 %v28
    %v119 = vunpack.c.l.b16 %v29
    %v120 = vunpack.c.h.b16 %v29
    %v121 = vunpack.c.l.b16 %v30
    %v122 = vunpack.c.h.b16 %v30
    %v123 = vunpack.c.l.b16 %v31
    %v124 = vunpack.c.h.b16 %v31
    %v125 = vunpack.c.l.b16 %v32
    %v126 = vunpack.c.h.b16 %v32
    %v127 = vunpack.c.l.b16 %v33
    %v128 = vunpack.c.h.b16 %v33
    %v129 = vunpack.c.l.b16 %v34
    %v130 = vunpack.c.h.b16 %v34
    %v131 = vunpack.c.l.b16 %v35
    %v132 = vunpack.c.h.b16 %v35
    %v133 = vunpack.c.l.b16 %v36
    %v134 = vunpack.c.h.b16 %v36
    %v135 = vunpack.c.l.b16 %v37
    %v136 = vunpack.c.h.b16 %v37
    %v137 = vunpack.c.l.b16 %v38
    %v138 = vunpack.c.h.b16 %v38
    %v139 = vunpack.c.l.b16 %v39
    %v140 = vunpack.c.h.b16 %v39
    %v141 = vunpack.c.l.b16 %v40
    %v142 = vunpack.c.h.b16 %v40
    %v143 = vunpack.c.l.b16 %v41
    %v144 = vunpack.c.h.b16 %v41
    %v145 = vunpack.c.l.b16 %v42
    %v146 = vunpack.c.h.b16 %v42
    %v147 = vunpack.c.l.b16 %v43
    %v148 = vunpack.c.h.b16 %v43
    %v149 = vunpack.c.l.b16 %v44
    %v150 = vunpack.c.h.b16 %v44
    %v151 = vunpack.c.l.b16 %v45
    %v152 = vunpack.c.h.b16 %v45
    %v153 = vunpack.c.l.b16 %v46
    %v154 = vunpack.c.h.b16 %v46
    %v155 = vunpack.c.l.b16 %v47
    %v156 = vunpack.c.h.b16 %v47
    %v157 = vunpack.c.l.b16 %v48
    %v158 = vunpack.c.h.b16 %v48
    %v159 = vunpack.c.l.b16 %v49
    %v160 = vunpack.c.h.b16 %v49
    %v161 = vunpack.c.l.b16 %v50
    %v162 = vunpack.c.h.b16 %v50
    %v163 = vunpack.c.l.b16 %v51
    %v164 = vunpack.c.h.b16 %v51
    %v165 = vunpack.c.l.b16 %v52
    %v166 = vunpack.c.h.b16 %v52
    %v167 = vunpack.c.l.b16 %v53
    %v168 = vunpack.c.h.b16 %v53
    %v169 = vunpack.c.l.b16 %v54
    %v170 = vunpack.c.h.b16 %v54
    %v171 = vunpack.c.l.b16 %v55
    %v172 = vunpack.c.h.b16 %v55
    %v173 = vunpack.c.l.b16 %v56
    %v174 = vunpack.c.h.b16 %v56
    %v175 = vpack.c.b16 %v115, %v111
    %v176 = vpack.c.b16 %v116, %v112
    %v177 = vpack.c.b16 %v117, %v113
    %v178 = vpack.c.b16 %v118, %v114
    %v179 = vpack.c.b16 %v123, %v119
    %v180 = vpack.c.b16 %v124, %v120
    %v181 = vpack.c.b16 %v125, %v121
    %v182 = vpack.c.b16 %v126, %v122
    %v183 = vpack.c.b16 %v131, %v127
    %v184 = vpack.c.b16 %v132, %v128
    %v185 = vpack.c.b16 %v133, %v129
    %v186 = vpack.c.b16 %v134, %v130
    %v187 = vpack.c.b16 %v139, %v135
    %v188 = vpack.c.b16 %v140, %v136
    %v189 = vpack.c.b16 %v141, %v137
    %v190 = vpack.c.b16 %v142, %v138
    %v191 = vpack.c.b16 %v147, %v143
    %v192 = vpack.c.b16 %v148, %v144
    %v193 = vpack.c.b16 %v149, %v145
    %v194 = vpack.c.b16 %v150, %v146
    %v195 = vpack.c.b16 %v155, %v151
    %v196 = vpack.c.b16 %v156, %v152
    %v197 = vpack.c.b16 %v157, %v153
    %v198 = vpack.c.b16 %v158, %v154
    %v199 = vpack.c.b16 %v163, %v159
    %v200 = vpack.c.b16 %v164, %v160
    %v201 = vpack.c.b16 %v165, %v161
    %v202 = vpack.c.b16 %v166, %v162
    %v203 = vpack.c.b16 %v171, %v167
    %v204 = vpack.c.b16 %v172, %v168
    %v205 = vpack.c.b16 %v173, %v169
    %v206 = vpack.c.b16 %v174, %v170
    %239 = vmatprep.subr.bf16.mxu0 %v176
    %240 = vmatpush1.bf16.msra.mxu0 %v175
    %241 = vmatprep.subr.bf16.mxu0 %v180
    %242 = vmatpush1.bf16.msra.mxu0 %v179
    %243 = vmatprep.subr.bf16.mxu0 %v184
    %244 = vmatpush1.bf16.msra.mxu0 %v183
    %245 = vmatprep.subr.bf16.mxu0 %v188
    %246 = vmatpush1.bf16.msra.mxu0 %v187
    %247 = vmatprep.subr.bf16.mxu0 %v192
    %248 = vmatpush1.bf16.msra.mxu0 %v191
    %249 = vmatprep.subr.bf16.mxu0 %v196
    %250 = vmatpush1.bf16.msra.mxu0 %v195
    %251 = vmatprep.subr.bf16.mxu0 %v200
    %252 = vmatpush1.bf16.msra.mxu0 %v199
    %253 = vmatprep.subr.bf16.mxu0 %v204
    %254 = vmatpush1.bf16.msra.mxu0 %v203
    %255 = vmatprep.subr.bf16.mxu0 0
    %256 = vmatpush1.bf16.msra.mxu0 0
    %257 = vmatprep.subr.bf16.mxu0 0
    %258 = vmatpush1.bf16.msra.mxu0 0
    %259 = vmatprep.subr.bf16.mxu0 0
    %260 = vmatpush1.bf16.msra.mxu0 0
    %261 = vmatprep.subr.bf16.mxu0 0
    %262 = vmatpush1.bf16.msra.mxu0 0
    %263 = vmatprep.subr.bf16.mxu0 0
    %264 = vmatpush1.bf16.msra.mxu0 0
    %265 = vmatprep.subr.bf16.mxu0 0
    %266 = vmatpush1.bf16.msra.mxu0 0
    %267 = vmatprep.subr.bf16.mxu0 0
    %268 = vmatpush1.bf16.msra.mxu0 0
    %269 = vmatprep.subr.bf16.mxu0 0
    %270 = vmatpush1.bf16.msra.mxu0 0
    %271 = vmatprep.mubr.bf16.mxu0 0
    %272 = vmatmul.mubr.bf16.gmra.mrb[0].mxu0 %v24
    %v273 = vpop.f32.mrb[0].mxu0
    %v274 = vadd.f32 %v62, %v273
    %v275 = vpop.f32.mrb[0].mxu0
    %v276 = vadd.f32 %v66, %v275
    %v277 = vpop.f32.mrb[0].mxu0
    %v278 = vpop.f32.mrb[0].mxu0
    %279 = vdwg.mxu0
    %280 = vmatprep.subr.bf16.mxu0 %v178
    %281 = vmatpush1.bf16.msra.mxu0 %v177
    %282 = vmatprep.subr.bf16.mxu0 %v182
    %283 = vmatpush1.bf16.msra.mxu0 %v181
    %284 = vmatprep.subr.bf16.mxu0 %v186
    %285 = vmatpush1.bf16.msra.mxu0 %v185
    %286 = vmatprep.subr.bf16.mxu0 %v190
    %287 = vmatpush1.bf16.msra.mxu0 %v189
    %288 = vmatprep.subr.bf16.mxu0 %v194
    %289 = vmatpush1.bf16.msra.mxu0 %v193
    %290 = vmatprep.subr.bf16.mxu0 %v198
    %291 = vmatpush1.bf16.msra.mxu0 %v197
    %292 = vmatprep.subr.bf16.mxu0 %v202
    %293 = vmatpush1.bf16.msra.mxu0 %v201
    %294 = vmatprep.subr.bf16.mxu0 %v206
    %295 = vmatpush1.bf16.msra.mxu0 %v205
    %296 = vmatprep.subr.bf16.mxu0 0
    %297 = vmatpush1.bf16.msra.mxu0 0
    %298 = vmatprep.subr.bf16.mxu0 0
    %299 = vmatpush1.bf16.msra.mxu0 0
    %300 = vmatprep.subr.bf16.mxu0 0
    %301 = vmatpush1.bf16.msra.mxu0 0
    %302 = vmatprep.subr.bf16.mxu0 0
    %303 = vmatpush1.bf16.msra.mxu0 0
    %304 = vmatprep.subr.bf16.mxu0 0
    %305 = vmatpush1.bf16.msra.mxu0 0
    %306 = vmatprep.subr.bf16.mxu0 0
    %307 = vmatpush1.bf16.msra.mxu0 0
    %308 = vmatprep.subr.bf16.mxu0 0
    %309 = vmatpush1.bf16.msra.mxu0 0
    %310 = vmatprep.subr.bf16.mxu0 0
    %311 = vmatpush1.bf16.msra.mxu0 0
    %312 = vmatprep.mubr.bf16.mxu0 0
    %313 = vmatmul.mubr.bf16.gmra.mrb[0].mxu0 %v24
    %v314 = vpop.f32.mrb[0].mxu0
    %v315 = vadd.f32 %v70, %v314
    %v316 = vpop.f32.mrb[0].mxu0
    %v317 = vadd.f32 %v74, %v316
    %v318 = vpop.f32.mrb[0].mxu0
    %v319 = vpop.f32.mrb[0].mxu0
    %320 = vdwg.mxu0
    %v321 = vmax.f32 %v274, 0.0
    %v322 = vmax.f32 %v276, 0.0
    %v323 = vmax.f32 %v315, 0.0
    %v324 = vmax.f32 %v317, 0.0
    %v325 = vld [vmem:[%s3] sm:$0xf]
    %v327 = vlaneseq
    %v328 = vshrl.u32 %v327, 7
    %v329 = vsub.s32 0, %v328
    %v330 = vrot.slane %v325, %v329
    %v331 = vlaneseq
    %v332 = vshrl.u32 %v331, 7
    %v333 = vsub.s32 1, %v332
    %v334 = vrot.slane %v325, %v333
    %v335 = vlaneseq
    %v336 = vshrl.u32 %v335, 7
    %v337 = vsub.s32 2, %v336
    %v338 = vrot.slane %v325, %v337
    %v339 = vlaneseq
    %v340 = vshrl.u32 %v339, 7
    %v341 = vsub.s32 3, %v340
    %v342 = vrot.slane %v325, %v341
    %v347 = vmul.f32 %v321, %v330
    %v348 = vmul.f32 %v322, %v334
    %v349 = vmul.f32 %v323, %v338
    %v350 = vmul.f32 %v324, %v342
    %v351 = vadd.f32 %v347, %v348
    %v352 = vadd.f32 %v351, %v349
    %v353 = vadd.f32 %v352, %v350
    %354 = vadd.xlane.f32.xlu0 %v353
    %v355 = vpop.xlane.xlu0 %354
    %s356 = sld [smem:[#allocation2]]
    %v357 = vstv %s356
    %v358 = vadd.f32 %v355, %v357
    %v359 = vsub.f32 0.0, %v358
    %v360 = vmul.f32 %v359, 1.442695
    %v361 = vpow.pop %v360
    %v362 = vadd.f32 %v361, 1.0
    %v363 = vrcp.pop %v362
    %v365 = vlaneseq
    %v366 = vand.u32 %v365, 127
    %v367 = vlaneseq
    %v368 = vshrl.u32 %v367, 7
    %v369 = vsub.s32 %v366, %v368
    %v370 = vrot.slane %v363, %v369
    %vm372 = vcmask 57344
    %373 = vst.msk [vmem:[#allocation3] sm:$0x1] %vm372, %v370
    // Predicated region
    $region22: #{embedding_classifier.1} parent=1 // pred_check
      _
    $region23: #{embedding_classifier.1} parent=1 // pred_check_branch
      %375 = sbr.rel (0) target = $region25
    $region24: #{embedding_classifier.1} parent=1 // pred_region
      %s377 = ssub.s32 16, 16
      %378 = vsyncadd [#allocation4], %s377
      %s380 = sshll.u32 [#allocation3], 4
      %s381 = int_to_ptr.vmem [resolvable:$true] %s380
      %383 = dma.vmem_to_hbm [thread:$0]  %s381, 16, %s5, [#allocation4]
    $region25: #{embedding_classifier.1} parent=1 // pred_fallthru
      _
    // Predicated region
    $region26: #{embedding_classifier.1} parent=1 // pred_check
      _
    $region27: #{embedding_classifier.1} parent=1 // pred_check_branch
      %385 = sbr.rel (0) target = $region29
    $region28: #{embedding_classifier.1} parent=1 // pred_region
      %386 = dma.done [#allocation4], 16
    $region29: #{embedding_classifier.1} parent=1 // pred_fallthru
      _
    %387 = vsyncpa [#allocation4], 1

</llo_original>
